<compile_context>
chip_gen: v7x
topology: tpu7x:2x2x1
jax: 0.10.0
libtpu: 0.0.40
codegen_flags: <defaults>
</compile_context>

<pallas_src>
import jax
import jax.numpy as jnp
from jax.experimental import pallas as pl
from jax.experimental.pallas import tpu as pltpu


def ncf_gather_kernel(u_idx_ref, m_idx_ref,   # (1, TB) int32 batch-index tiles
                      su_ref, sm_ref,         # (NU, 1) / (NM, 1) f32 score vectors
                      o_ref):                 # (1, TB) f32 lane-dense output tile
    nu = su_ref.shape[0]
    nm = sm_ref.shape[0]
    tb = o_ref.shape[1]

    u_idx = u_idx_ref[...]                                            # (1, TB)
    m_idx = m_idx_ref[...]                                            # (1, TB)

    # One-hot gather of the precomputed per-row scores for this batch tile,
    # fused with jnp.where (no int->f32 cast, no extra multiply).  The batch
    # stays on the lane axis throughout -> unmasked, lane-dense loads/stores.
    row_u = jax.lax.broadcasted_iota(jnp.int32, (nu, tb), 0)          # (NU, TB)
    row_m = jax.lax.broadcasted_iota(jnp.int32, (nm, tb), 0)          # (NM, TB)

    g_u = jnp.sum(jnp.where(row_u == u_idx, su_ref[...], 0.0),
                  axis=0, keepdims=True)                              # (1, TB)
    g_m = jnp.sum(jnp.where(row_m == m_idx, sm_ref[...], 0.0),
                  axis=0, keepdims=True)                              # (1, TB)

    o_ref[...] = (g_u + g_m).astype(o_ref.dtype)


def ncf_forward(user, movie, user_factors, movie_factors, lin_w, lin_b,
                *, tile_b=2048):
    """user, movie: (B,) integer indices.  Returns (B, 1) float32 scores."""
    B = user.shape[0]
    n_users, F = user_factors.shape
    n_movies = movie_factors.shape[0]

    # Lane-dense batch tile: multiple of 128, clamped to the (padded) batch so
    # tiny demo batches don't pay for a huge padded tile.
    tile_b = int(min(tile_b, max(128, ((B + 127) // 128) * 128)))
    tile_b = ((tile_b + 127) // 128) * 128

    num_tiles = pl.cdiv(B, tile_b)
    b_pad = num_tiles * tile_b

    # Pad the batch to a whole number of lane-dense tiles (pad indices gather
    # row 0; their outputs are discarded by the final slice).
    u_idx = jnp.pad(user.astype(jnp.int32), (0, b_pad - B)).reshape(num_tiles, tile_b)
    m_idx = jnp.pad(movie.astype(jnp.int32), (0, b_pad - B)).reshape(num_tiles, tile_b)

    # Rank-1 collapse of cat + Linear, hoisted out of the kernel: two tiny
    # matvecs over the factor tables, bias folded into the user scores.
    # PyTorch Linear weight is (1, 2F): first F columns act on the user half.
    w = lin_w.reshape(2 * F).astype(jnp.float32)
    b0 = lin_b.reshape(1).astype(jnp.float32)[0]
    scores_u = (user_factors.astype(jnp.float32) @ w[:F] + b0).reshape(n_users, 1)
    scores_m = (movie_factors.astype(jnp.float32) @ w[F:]).reshape(n_movies, 1)

    out_tiles = pl.pallas_call(
        ncf_gather_kernel,
        out_shape=jax.ShapeDtypeStruct((num_tiles, tile_b), jnp.float32),
        grid=(num_tiles,),
        in_specs=[
            pl.BlockSpec((1, tile_b), lambda i: (i, 0)),       # user idx tile
            pl.BlockSpec((1, tile_b), lambda i: (i, 0)),       # movie idx tile
            pl.BlockSpec((n_users, 1), lambda i: (0, 0)),      # user score vector
            pl.BlockSpec((n_movies, 1), lambda i: (0, 0)),     # movie score vector
        ],
        out_specs=pl.BlockSpec((1, tile_b), lambda i: (i, 0)),  # lane-dense output
        compiler_params=pltpu.CompilerParams(
            dimension_semantics=("parallel",)),
    )(u_idx, m_idx, scores_u, scores_m)

    return out_tiles.reshape(b_pad, 1)[:B]


if __name__ == "__main__":
    n_users, n_movies, n_factors = 30, 40, 50
    batch = 8

    key = jax.random.PRNGKey(0)
    k_u, k_m, k_w, k_b, k_ui, k_mi = jax.random.split(key, 6)

    # Deterministic synthetic parameters (shapes match the PyTorch module).
    user_factors = jax.random.normal(k_u, (n_users, n_factors), jnp.float32)
    movie_factors = jax.random.normal(k_m, (n_movies, n_factors), jnp.float32)
    bound = 1.0 / jnp.sqrt(2.0 * n_factors)
    lin_w = jax.random.uniform(k_w, (1, 2 * n_factors), jnp.float32, -bound, bound)
    lin_b = jax.random.uniform(k_b, (1,), jnp.float32, -bound, bound)

    user = jax.random.randint(k_ui, (batch,), 0, n_users, jnp.int32)
    movie = jax.random.randint(k_mi, (batch,), 0, n_movies, jnp.int32)

    out = ncf_forward(user, movie, user_factors, movie_factors, lin_w, lin_b)
    out = jax.block_until_ready(out)

    # Pure-JAX reference for sanity.
    ref = (jnp.concatenate([user_factors[user], movie_factors[movie]], axis=1)
           @ lin_w.T + lin_b)
    assert out.shape == (batch, 1)
    assert jnp.allclose(out, ref, atol=2e-5, rtol=1e-5)

    print("KERNEL_OK")
</pallas_src>

<mosaic_0001>
module attributes {stable_mosaic.version = 11 : i64} {
  func.func @ncf_gather_kernel(%arg0: i32, %arg1: memref<1x128xi32, #tpu.memory_space<vmem>>, %arg2: memref<1x128xi32, #tpu.memory_space<vmem>>, %arg3: memref<30x1xf32, #tpu.memory_space<vmem>>, %arg4: memref<40x1xf32, #tpu.memory_space<vmem>>, %arg5: memref<1x128xf32, #tpu.memory_space<vmem>>) attributes {dimension_semantics = [#tpu.dimension_semantics<parallel>], iteration_bounds = array<i64: 1>, scalar_prefetch = 0 : i64, scratch_operands = 0 : i64, tpu.core_type = #tpu.core_type<tc>, window_params = [{transform_indices = @transform_0, window_bounds = array<i64: 1, 128>}, {transform_indices = @transform_1, window_bounds = array<i64: 1, 128>}, {pipeline_mode = #tpu.pipeline_mode<synchronous>, transform_indices = @transform_2, window_bounds = array<i64: 30, 1>}, {pipeline_mode = #tpu.pipeline_mode<synchronous>, transform_indices = @transform_3, window_bounds = array<i64: 40, 1>}, {transform_indices = @transform_4, window_bounds = array<i64: 1, 128>}]} {
    %c0 = arith.constant 0 : index
    %c0_0 = arith.constant 0 : index
    %0 = vector.load %arg1[%c0, %c0_0] : memref<1x128xi32, #tpu.memory_space<vmem>>, vector<1x128xi32>
    %c0_1 = arith.constant 0 : index
    %c0_2 = arith.constant 0 : index
    %1 = vector.load %arg2[%c0_1, %c0_2] : memref<1x128xi32, #tpu.memory_space<vmem>>, vector<1x128xi32>
    %2 = tpu.iota {dimensions = array<i32: 0>} : vector<30x128xi32>
    %3 = tpu.iota {dimensions = array<i32: 0>} : vector<40x128xi32>
    %4 = vector.broadcast %0 : vector<1x128xi32> to vector<30x128xi32>
    %5 = arith.cmpi eq, %2, %4 : vector<30x128xi32>
    %c0_3 = arith.constant 0 : index
    %c0_4 = arith.constant 0 : index
    %6 = vector.load %arg3[%c0_3, %c0_4] : memref<30x1xf32, #tpu.memory_space<vmem>>, vector<30x1xf32>
    %cst = arith.constant 0.000000e+00 : f32
    %7 = vector.shape_cast %6 : vector<30x1xf32> to vector<30x1xf32>
    %8 = vector.broadcast %7 : vector<30x1xf32> to vector<30x128xf32>
    %9 = vector.broadcast %cst : f32 to vector<30x128xf32>
    %10 = arith.select %5, %8, %9 : vector<30x128xi1>, vector<30x128xf32>
    %cst_5 = arith.constant dense<0.000000e+00> : vector<128xf32>
    %11 = vector.multi_reduction <add>, %10, %cst_5 [0] : vector<30x128xf32> to vector<128xf32>
    %12 = vector.shape_cast %11 : vector<128xf32> to vector<1x128xf32>
    %13 = vector.broadcast %1 : vector<1x128xi32> to vector<40x128xi32>
    %14 = arith.cmpi eq, %3, %13 : vector<40x128xi32>
    %c0_6 = arith.constant 0 : index
    %c0_7 = arith.constant 0 : index
    %15 = vector.load %arg4[%c0_6, %c0_7] : memref<40x1xf32, #tpu.memory_space<vmem>>, vector<40x1xf32>
    %cst_8 = arith.constant 0.000000e+00 : f32
    %16 = vector.shape_cast %15 : vector<40x1xf32> to vector<40x1xf32>
    %17 = vector.broadcast %16 : vector<40x1xf32> to vector<40x128xf32>
    %18 = vector.broadcast %cst_8 : f32 to vector<40x128xf32>
    %19 = arith.select %14, %17, %18 : vector<40x128xi1>, vector<40x128xf32>
    %cst_9 = arith.constant dense<0.000000e+00> : vector<128xf32>
    %20 = vector.multi_reduction <add>, %19, %cst_9 [0] : vector<40x128xf32> to vector<128xf32>
    %21 = vector.shape_cast %20 : vector<128xf32> to vector<1x128xf32>
    %22 = arith.addf %12, %21 : vector<1x128xf32>
    %c0_10 = arith.constant 0 : index
    %c0_11 = arith.constant 0 : index
    %23 = vector.load %arg5[%c0_10, %c0_11] : memref<1x128xf32, #tpu.memory_space<vmem>>, vector<1x128xf32>
    tpu.vector_store %arg5[%c0_10, %c0_11], %22 {strides = array<i32>} : memref<1x128xf32, #tpu.memory_space<vmem>>, vector<1x128xf32>,
    return
  }
  func.func @transform_0(%arg0: i32) -> (i32, i32) {
    %c0_i32 = arith.constant 0 : i32
    %c0_i32_0 = arith.constant 0 : i32
    return %arg0, %c0_i32 : i32, i32
  }
  func.func @transform_1(%arg0: i32) -> (i32, i32) {
    %c0_i32 = arith.constant 0 : i32
    %c0_i32_0 = arith.constant 0 : i32
    return %arg0, %c0_i32 : i32, i32
  }
  func.func @transform_2(%arg0: i32) -> (i32, i32) {
    %c0_i32 = arith.constant 0 : i32
    %c0_i32_0 = arith.constant 0 : i32
    %c0_i32_1 = arith.constant 0 : i32
    return %c0_i32, %c0_i32_0 : i32, i32
  }
  func.func @transform_3(%arg0: i32) -> (i32, i32) {
    %c0_i32 = arith.constant 0 : i32
    %c0_i32_0 = arith.constant 0 : i32
    %c0_i32_1 = arith.constant 0 : i32
    return %c0_i32, %c0_i32_0 : i32, i32
  }
  func.func @transform_4(%arg0: i32) -> (i32, i32) {
    %c0_i32 = arith.constant 0 : i32
    %c0_i32_0 = arith.constant 0 : i32
    return %arg0, %c0_i32 : i32, i32
  }
}

</mosaic_0001>

<llo_original>
// kernel: tpu_custom_call.1
$region0: #{tpu_custom_call.1}
  #allocation0 [shape = 'u32[]', space=smem, size = 0x4, offset = 0x4, fixed_abs, tag = 'smem constant byte address 0x4 - core index']
  #allocation1 [shape = 'u32[144,128]{1,0:T(1,128)}', space=vmem, size = 0x12000, scoped, tag = 'internal scratch']
  %s0 = inlined_call_operand.vmem [shape: s32[1,128], index: 0, kind: input, shape index: {}]
  %s1 = inlined_call_operand.vmem [shape: s32[1,128], index: 1, kind: input, shape index: {}]
  %s2 = inlined_call_operand.vmem [shape: f32[30,1], index: 2, kind: input, shape index: {}]
  %s3 = inlined_call_operand.vmem [shape: f32[40,1], index: 3, kind: input, shape index: {}]
  %s4 = inlined_call_operand.hbm [shape: f32[1,128], index: 4, kind: output, shape index: {}]
  %s5 = sld [smem:[#allocation0]]
  $region26: #{tpu_custom_call.1} parent=0
    _
  %s7 = ssub.s32 1, %s5
  %s8 = scalar_select 0, %s7, %s5
  $region1: #{tpu_custom_call.1} parent=0
    #allocation2 [shape = 'u8[512]{0}', space=vmem, size = 0x400, scoped, tag = 'output window, operand 0, single buffered']
    #allocation3 [shape = 's32[1]{0}', space=sflag, size = 0x4, scoped, tag = 'scoped memory for tpu_custom_call.1']
    %9 = vsyncpa [#allocation3], 0
    // Predicated region
    $region2: #{tpu_custom_call.1} parent=1 // pred_check
      _
    $region3: #{tpu_custom_call.1} parent=1 // pred_check_branch
      %11 = sbr.rel (0) target = $region5
    $region4: #{tpu_custom_call.1} parent=1 // pred_region
      _
    $region5: #{tpu_custom_call.1} parent=1 // pred_fallthru
      _
    // Predicated region
    $region6: #{tpu_custom_call.1} parent=1 // pred_check
      _
    $region7: #{tpu_custom_call.1} parent=1 // pred_check_branch
      %13 = sbr.rel (0) target = $region9
    $region8: #{tpu_custom_call.1} parent=1 // pred_region
      _
    $region9: #{tpu_custom_call.1} parent=1 // pred_fallthru
      _
    // Predicated region
    $region10: #{tpu_custom_call.1} parent=1 // pred_check
      _
    $region11: #{tpu_custom_call.1} parent=1 // pred_check_branch
      %15 = sbr.rel (0) target = $region13
    $region12: #{tpu_custom_call.1} parent=1 // pred_region
      _
    $region13: #{tpu_custom_call.1} parent=1 // pred_fallthru
      _
    // Predicated region
    $region14: #{tpu_custom_call.1} parent=1 // pred_check
      _
    $region15: #{tpu_custom_call.1} parent=1 // pred_check_branch
      %17 = sbr.rel (0) target = $region17
    $region16: #{tpu_custom_call.1} parent=1 // pred_region
      _
    $region17: #{tpu_custom_call.1} parent=1 // pred_fallthru
      _
    %v18 = vld [vmem:[%s0] sm:$0x1]
    %v19 = vld [vmem:[%s1] sm:$0x1]
    %v20 = vlaneseq
    %v21 = vshrl.u32 %v20, 7
    %v22 = vadd.s32 %v21, 8
    %v23 = vadd.s32 %v21, 16
    %v24 = vadd.s32 %v21, 24
    %v25 = vadd.s32 %v21, 32
    %v26 = vlaneseq
    %v27 = vshrl.u32 %v26, 7
    %v28 = vsub.s32 0, %v27
    %v29 = vrot.slane %v18, %v28
    %vm30 = vcmp.eq.s32.totalorder %v21, %v29
    %vm31 = vcmp.eq.s32.totalorder %v22, %v29
    %vm32 = vcmp.eq.s32.totalorder %v23, %v29
    %vm33 = vcmp.eq.s32.totalorder %v24, %v29
    %v34 = vld [vmem:[%s2] sm:$0xff]
    %v35 = vld [vmem:[%s2 + $0x8] sm:$0xff]
    %v36 = vld [vmem:[%s2 + $0x10] sm:$0xff]
    %v37 = vld [vmem:[%s2 + $0x18] sm:$0x3f]
    %39 = vset.pattern.permute.xlu0 0
    %40 = vperm.xlu0 %39, %v34
    %v41 = vpop.permute.xlu0 %40
    %44 = vset.pattern.permute.xlu0 0
    %45 = vperm.xlu0 %44, %v35
    %v46 = vpop.permute.xlu0 %45
    %49 = vset.pattern.permute.xlu0 0
    %50 = vperm.xlu0 %49, %v36
    %v51 = vpop.permute.xlu0 %50
    %54 = vset.pattern.permute.xlu0 0
    %55 = vperm.xlu0 %54, %v37
    %v56 = vpop.permute.xlu0 %55
    %v58 = vsel %vm30, %v41, 0.0
    %v59 = vsel %vm31, %v46, 0.0
    %v60 = vsel %vm32, %v51, 0.0
    %v61 = vsel %vm33, %v56, 0.0
    %v62 = vadd.f32 %v58, %v59
    %v63 = vadd.f32 %v62, %v60
    %vm64 = vcmask 1045504
    %v65 = vsel %vm64, %v61, 0.0
    %v66 = vadd.f32 %v63, %v65
    %v67 = vrot.slane %v66, 4
    %v68 = vadd.f32 %v66, %v67
    %v69 = vrot.slane %v68, 2
    %v70 = vadd.f32 %v68, %v69
    %v71 = vrot.slane %v70, 1
    %v72 = vadd.f32 %v70, %v71
    %v73 = vlaneseq
    %v74 = vshrl.u32 %v73, 7
    %v75 = vsub.s32 0, %v74
    %v76 = vrot.slane %v19, %v75
    %vm77 = vcmp.eq.s32.totalorder %v21, %v76
    %vm78 = vcmp.eq.s32.totalorder %v22, %v76
    %vm79 = vcmp.eq.s32.totalorder %v23, %v76
    %vm80 = vcmp.eq.s32.totalorder %v24, %v76
    %vm81 = vcmp.eq.s32.totalorder %v25, %v76
    %v82 = vld [vmem:[%s3] sm:$0xff]
    %v83 = vld [vmem:[%s3 + $0x8] sm:$0xff]
    %v84 = vld [vmem:[%s3 + $0x10] sm:$0xff]
    %v85 = vld [vmem:[%s3 + $0x18] sm:$0xff]
    %v86 = vld [vmem:[%s3 + $0x20] sm:$0xff]
    %88 = vset.pattern.permute.xlu0 0
    %89 = vperm.xlu0 %88, %v82
    %v90 = vpop.permute.xlu0 %89
    %93 = vset.pattern.permute.xlu0 0
    %94 = vperm.xlu0 %93, %v83
    %v95 = vpop.permute.xlu0 %94
    %98 = vset.pattern.permute.xlu0 0
    %99 = vperm.xlu0 %98, %v84
    %v100 = vpop.permute.xlu0 %99
    %103 = vset.pattern.permute.xlu0 0
    %104 = vperm.xlu0 %103, %v85
    %v105 = vpop.permute.xlu0 %104
    %108 = vset.pattern.permute.xlu0 0
    %109 = vperm.xlu0 %108, %v86
    %v110 = vpop.permute.xlu0 %109
    %v112 = vsel %vm77, %v90, 0.0
    %v113 = vsel %vm78, %v95, 0.0
    %v114 = vsel %vm79, %v100, 0.0
    %v115 = vsel %vm80, %v105, 0.0
    %v116 = vsel %vm81, %v110, 0.0
    %v117 = vadd.f32 %v112, %v113
    %v118 = vadd.f32 %v117, %v114
    %v119 = vadd.f32 %v118, %v115
    %v120 = vadd.f32 %v119, %v116
    %v121 = vrot.slane %v120, 4
    %v122 = vadd.f32 %v120, %v121
    %v123 = vrot.slane %v122, 2
    %v124 = vadd.f32 %v122, %v123
    %v125 = vrot.slane %v124, 1
    %v126 = vadd.f32 %v124, %v125
    %v127 = vadd.f32 %v72, %v126
    %128 = vst [vmem:[#allocation2] sm:$0x1] %v127
    // Predicated region
    $region18: #{tpu_custom_call.1} parent=1 // pred_check
      _
    $region19: #{tpu_custom_call.1} parent=1 // pred_check_branch
      %130 = sbr.rel (0) target = $region21
    $region20: #{tpu_custom_call.1} parent=1 // pred_region
      %s132 = ssub.s32 16, 16
      %133 = vsyncadd [#allocation3], %s132
      %s135 = sshll.u32 [#allocation2], 4
      %s136 = int_to_ptr.vmem [resolvable:$true] %s135
      %138 = dma.vmem_to_hbm [thread:$0]  %s136, 16, %s4, [#allocation3]
    $region21: #{tpu_custom_call.1} parent=1 // pred_fallthru
      _
    // Predicated region
    $region22: #{tpu_custom_call.1} parent=1 // pred_check
      _
    $region23: #{tpu_custom_call.1} parent=1 // pred_check_branch
      %140 = sbr.rel (0) target = $region25
    $region24: #{tpu_custom_call.1} parent=1 // pred_region
      %141 = dma.done [#allocation3], 16
    $region25: #{tpu_custom_call.1} parent=1 // pred_fallthru
      _
    %142 = vsyncpa [#allocation3], 1

</llo_original>
